<compile_context>
chip_gen: v7x
topology: tpu7x:2x2x1
jax: 0.10.0
libtpu: 0.0.40
codegen_flags: <defaults>
</compile_context>

<pallas_src>
import functools

import jax
import jax.numpy as jnp
from jax import lax
from jax.experimental import pallas as pl
from jax.experimental.pallas import tpu as pltpu


def _conv3x3_s2_kernel(xw_ref, w_ref, o_ref):
    # xw_ref: (NB, 4, HO*WO, 4*Cin) bf16, pre-windowed / parity-split input:
    #         xw[n, 2a+b, oy*WO+ox, (2p+q)*Cin + c] == x_pad[n, 2(oy+a)+p, 2(ox+b)+q, c]
    # w_ref : (9*Cin, Cout) bf16, rows ordered (dy, dx, cin)  (HWIO flattened)
    # o_ref : (NB*HO*WO, Cout) f32, rows ordered (n, oy, ox)
    cin = xw_ref.shape[-1] // 4

    # Gather the nine 3x3 taps; each is a contiguous 64-lane slice (no strided
    # or sublane-sliced loads), then build one deep-K im2col operand.
    taps = []
    for dy in range(3):
        a, p = divmod(dy, 2)          # 2(oy+a)+p == 2*oy + dy
        for dx in range(3):
            b, q = divmod(dx, 2)      # 2(ox+b)+q == 2*ox + dx
            taps.append(xw_ref[:, 2 * a + b, :, pl.ds((2 * p + q) * cin, cin)])

    patch = jnp.concatenate(taps, axis=-1)          # (NB, HO*WO, 9*Cin) bf16
    patch = patch.reshape(o_ref.shape[0], w_ref.shape[0])  # aligned row merge

    # Single K=576 MXU matmul, bf16 inputs, f32 accumulation, dense 128-lane store.
    o_ref[...] = jnp.dot(patch, w_ref[...], preferred_element_type=jnp.float32)


@functools.partial(jax.jit, static_argnames=("batch_block",))
def simple_net_forward(x_nchw, w_hwio, *, batch_block=8):
    """y = flatten(Conv2d(3x3, stride=2, pad=1, no bias)(x), 1)  (torch NCHW semantics)."""
    n, cin, h, w = x_nchw.shape
    kh, kw, wcin, cout = w_hwio.shape
    assert (kh, kw) == (3, 3) and wcin == cin
    ho = (h + 2 - kh) // 2 + 1
    wo = (w + 2 - kw) // 2 + 1

    # ---- wrapper-side layout plumbing (fused by XLA into the input copy) ----
    hp = h + 2 + ((h + 2) % 2)          # padded extent, rounded up to even
    wp = w + 2 + ((w + 2) % 2)
    xb = jnp.transpose(x_nchw, (0, 2, 3, 1)).astype(jnp.bfloat16)     # NHWC, bf16
    xp = jnp.pad(xb, ((0, 0), (1, hp - h - 1), (1, wp - w - 1), (0, 0)))
    # space-to-depth the stride-2 parity into channels: (N, hp/2, wp/2, 4*Cin)
    xr = xp.reshape(n, hp // 2, 2, wp // 2, 2, cin)
    xr = jnp.transpose(xr, (0, 1, 3, 2, 4, 5)).reshape(n, hp // 2, wp // 2, 4 * cin)
    # pre-window the four (a, b) = (dy//2, dx//2) offsets and flatten (oy, ox)
    xw = jnp.stack(
        [xr[:, a:a + ho, b:b + wo, :].reshape(n, ho * wo, 4 * cin)
         for a in (0, 1) for b in (0, 1)],
        axis=1)                                        # (N, 4, HO*WO, 4*Cin)

    w2 = w_hwio.reshape(kh * kw * cin, cout).astype(jnp.bfloat16)   # (576, Cout)

    nb = min(batch_block, n)
    while n % nb:                       # largest batch block that divides N
        nb -= 1
    rows = nb * ho * wo                 # 8 * 16 = 128 rows per grid step

    out = pl.pallas_call(
        _conv3x3_s2_kernel,
        out_shape=jax.ShapeDtypeStruct((n * ho * wo, cout), jnp.float32),
        grid_spec=pltpu.PrefetchScalarGridSpec(
            num_scalar_prefetch=0,
            grid=(n // nb,),
            in_specs=[
                pl.BlockSpec((nb, 4, ho * wo, 4 * cin), lambda i: (i, 0, 0, 0)),
                pl.BlockSpec((kh * kw * cin, cout), lambda i: (0, 0)),
            ],
            out_specs=pl.BlockSpec((rows, cout), lambda i: (i, 0)),
        ),
        compiler_params=pltpu.CompilerParams(
            dimension_semantics=("parallel",)),   # megacore / 2nd TC on v7x
    )(xw, w2)

    # Rows are (n, oy, ox); torch.flatten(NCHW, 1) wants (c, oy, ox) per image.
    y = out.reshape(n, ho, wo, cout)
    return jnp.transpose(y, (0, 3, 1, 2)).reshape(n, cout * ho * wo)


def _reference_forward(x_nchw, w_hwio):
    """Pure-JAX reference (lax.conv). Inputs rounded to bf16 like the kernel."""
    xb = x_nchw.astype(jnp.bfloat16).astype(jnp.float32)
    wb = w_hwio.astype(jnp.bfloat16).astype(jnp.float32)
    y = lax.conv_general_dilated(
        jnp.transpose(xb, (0, 2, 3, 1)), wb,
        window_strides=(2, 2), padding=((1, 1), (1, 1)),
        dimension_numbers=("NHWC", "HWIO", "NHWC"),
        preferred_element_type=jnp.float32,
        precision=lax.Precision.HIGHEST)
    y = jnp.transpose(y, (0, 3, 1, 2))                 # NCHW
    return y.reshape(y.shape[0], -1)                   # torch.flatten(x1, 1)


if __name__ == "__main__":
    key = jax.random.PRNGKey(0)
    kx, kw = jax.random.split(key)

    # Shapes fixed by the module / its test input: x = torch.rand(64, 64, 7, 7).
    x = jax.random.uniform(kx, (64, 64, 7, 7), jnp.float32)            # NCHW
    # Conv2d(64, 128, 3x3) weight, stored HWIO (== torch OIHW transposed).
    w_hwio = 0.05 * jax.random.normal(kw, (3, 3, 64, 128), jnp.float32)

    out = jax.block_until_ready(simple_net_forward(x, w_hwio))
    ref = _reference_forward(x, w_hwio)

    assert out.shape == (64, 128 * 4 * 4), out.shape
    assert out.shape == ref.shape, (out.shape, ref.shape)
    max_err = float(jnp.max(jnp.abs(out - ref)))
    assert jnp.allclose(out, ref, atol=1e-3, rtol=1e-3), f"max_err={max_err}"

    print("KERNEL_OK")
</pallas_src>

<mosaic_0001>
module attributes {stable_mosaic.version = 11 : i64} {
  func.func @_conv3x3_s2_kernel(%arg0: i32, %arg1: memref<8x4x16x256xbf16, #tpu.memory_space<vmem>>, %arg2: memref<576x128xbf16, #tpu.memory_space<vmem>>, %arg3: memref<128x128xf32, #tpu.memory_space<vmem>>) attributes {dimension_semantics = [#tpu.dimension_semantics<parallel>], iteration_bounds = array<i64: 8>, scalar_prefetch = 0 : i64, scratch_operands = 0 : i64, tpu.core_type = #tpu.core_type<tc>, window_params = [{transform_indices = @transform_0, window_bounds = array<i64: 8, 4, 16, 256>}, {pipeline_mode = #tpu.pipeline_mode<synchronous>, transform_indices = @transform_1, window_bounds = array<i64: 576, 128>}, {transform_indices = @transform_2, window_bounds = array<i64: 128, 128>}]} {
    %c0 = arith.constant 0 : index
    %c0_0 = arith.constant 0 : index
    %c0_1 = arith.constant 0 : index
    %c0_2 = arith.constant 0 : index
    %0 = vector.load %arg1[%c0, %c0_0, %c0_1, %c0_2] : memref<8x4x16x256xbf16, #tpu.memory_space<vmem>>, vector<8x1x16x64xbf16>
    %1 = vector.shape_cast %0 : vector<8x1x16x64xbf16> to vector<8x16x64xbf16>
    %c0_3 = arith.constant 0 : index
    %c0_4 = arith.constant 0 : index
    %c0_5 = arith.constant 0 : index
    %c64 = arith.constant 64 : index
    %2 = vector.load %arg1[%c0_3, %c0_4, %c0_5, %c64] : memref<8x4x16x256xbf16, #tpu.memory_space<vmem>>, vector<8x1x16x64xbf16>
    %3 = vector.shape_cast %2 : vector<8x1x16x64xbf16> to vector<8x16x64xbf16>
    %c0_6 = arith.constant 0 : index
    %c1 = arith.constant 1 : index
    %c0_7 = arith.constant 0 : index
    %c0_8 = arith.constant 0 : index
    %4 = vector.load %arg1[%c0_6, %c1, %c0_7, %c0_8] : memref<8x4x16x256xbf16, #tpu.memory_space<vmem>>, vector<8x1x16x64xbf16>
    %5 = vector.shape_cast %4 : vector<8x1x16x64xbf16> to vector<8x16x64xbf16>
    %c0_9 = arith.constant 0 : index
    %c0_10 = arith.constant 0 : index
    %c0_11 = arith.constant 0 : index
    %c128 = arith.constant 128 : index
    %6 = vector.load %arg1[%c0_9, %c0_10, %c0_11, %c128] : memref<8x4x16x256xbf16, #tpu.memory_space<vmem>>, vector<8x1x16x64xbf16>
    %7 = vector.shape_cast %6 : vector<8x1x16x64xbf16> to vector<8x16x64xbf16>
    %c0_12 = arith.constant 0 : index
    %c0_13 = arith.constant 0 : index
    %c0_14 = arith.constant 0 : index
    %c192 = arith.constant 192 : index
    %8 = vector.load %arg1[%c0_12, %c0_13, %c0_14, %c192] : memref<8x4x16x256xbf16, #tpu.memory_space<vmem>>, vector<8x1x16x64xbf16>
    %9 = vector.shape_cast %8 : vector<8x1x16x64xbf16> to vector<8x16x64xbf16>
    %c0_15 = arith.constant 0 : index
    %c1_16 = arith.constant 1 : index
    %c0_17 = arith.constant 0 : index
    %c128_18 = arith.constant 128 : index
    %10 = vector.load %arg1[%c0_15, %c1_16, %c0_17, %c128_18] : memref<8x4x16x256xbf16, #tpu.memory_space<vmem>>, vector<8x1x16x64xbf16>
    %11 = vector.shape_cast %10 : vector<8x1x16x64xbf16> to vector<8x16x64xbf16>
    %c0_19 = arith.constant 0 : index
    %c2 = arith.constant 2 : index
    %c0_20 = arith.constant 0 : index
    %c0_21 = arith.constant 0 : index
    %12 = vector.load %arg1[%c0_19, %c2, %c0_20, %c0_21] : memref<8x4x16x256xbf16, #tpu.memory_space<vmem>>, vector<8x1x16x64xbf16>
    %13 = vector.shape_cast %12 : vector<8x1x16x64xbf16> to vector<8x16x64xbf16>
    %c0_22 = arith.constant 0 : index
    %c2_23 = arith.constant 2 : index
    %c0_24 = arith.constant 0 : index
    %c64_25 = arith.constant 64 : index
    %14 = vector.load %arg1[%c0_22, %c2_23, %c0_24, %c64_25] : memref<8x4x16x256xbf16, #tpu.memory_space<vmem>>, vector<8x1x16x64xbf16>
    %15 = vector.shape_cast %14 : vector<8x1x16x64xbf16> to vector<8x16x64xbf16>
    %c0_26 = arith.constant 0 : index
    %c3 = arith.constant 3 : index
    %c0_27 = arith.constant 0 : index
    %c0_28 = arith.constant 0 : index
    %16 = vector.load %arg1[%c0_26, %c3, %c0_27, %c0_28] : memref<8x4x16x256xbf16, #tpu.memory_space<vmem>>, vector<8x1x16x64xbf16>
    %17 = vector.shape_cast %16 : vector<8x1x16x64xbf16> to vector<8x16x64xbf16>
    %18 = tpu.concatenate %1, %3, %5, %7, %9, %11, %13, %15, %17 in 2 : vector<8x16x64xbf16>, vector<8x16x64xbf16>, vector<8x16x64xbf16>, vector<8x16x64xbf16>, vector<8x16x64xbf16>, vector<8x16x64xbf16>, vector<8x16x64xbf16>, vector<8x16x64xbf16>, vector<8x16x64xbf16> -> vector<8x16x576xbf16>
    %19 = vector.shape_cast %18 : vector<8x16x576xbf16> to vector<128x576xbf16>
    %c0_29 = arith.constant 0 : index
    %c0_30 = arith.constant 0 : index
    %20 = vector.load %arg2[%c0_29, %c0_30] : memref<576x128xbf16, #tpu.memory_space<vmem>>, vector<576x128xbf16>
    %cst = arith.constant dense<0.000000e+00> : vector<128x128xf32>
    %21 = tpu.matmul %19, %20, %cst {dimension_numbers = #tpu.dot_dimension_numbers<[1], [0], [0], [1], [0, 0, 1, 1], [], []>} : vector<128x576xbf16>, vector<576x128xbf16>, vector<128x128xf32> -> vector<128x128xf32>
    %c0_31 = arith.constant 0 : index
    %c0_32 = arith.constant 0 : index
    %22 = vector.load %arg3[%c0_31, %c0_32] : memref<128x128xf32, #tpu.memory_space<vmem>>, vector<128x128xf32>
    tpu.vector_store %arg3[%c0_31, %c0_32], %21 {strides = array<i32>} : memref<128x128xf32, #tpu.memory_space<vmem>>, vector<128x128xf32>,
    return
  }
  func.func @transform_0(%arg0: i32) -> (i32, i32, i32, i32) {
    %c0_i32 = arith.constant 0 : i32
    %c0_i32_0 = arith.constant 0 : i32
    %c0_i32_1 = arith.constant 0 : i32
    %c0_i32_2 = arith.constant 0 : i32
    return %arg0, %c0_i32, %c0_i32_0, %c0_i32_1 : i32, i32, i32, i32
  }
  func.func @transform_1(%arg0: i32) -> (i32, i32) {
    %c0_i32 = arith.constant 0 : i32
    %c0_i32_0 = arith.constant 0 : i32
    %c0_i32_1 = arith.constant 0 : i32
    return %c0_i32, %c0_i32_0 : i32, i32
  }
  func.func @transform_2(%arg0: i32) -> (i32, i32) {
    %c0_i32 = arith.constant 0 : i32
    %c0_i32_0 = arith.constant 0 : i32
    return %arg0, %c0_i32 : i32, i32
  }
}

</mosaic_0001>

<llo_original>
// kernel: simple_net_forward.1
$region0: #{simple_net_forward.1}
  #allocation0 [shape = 'u32[]', space=smem, size = 0x4, offset = 0x4, fixed_abs, tag = 'smem constant byte address 0x4 - core index']
  #allocation1 [shape = 'u32[144,128]{1,0:T(1,128)}', space=vmem, size = 0x12000, scoped, tag = 'internal scratch']
  %s0 = inlined_call_operand.vmem [shape: bf16[64,4,16,256], index: 0, kind: input, shape index: {}]
  %s1 = inlined_call_operand.vmem [shape: bf16[576,128], index: 1, kind: input, shape index: {}]
  %s2 = inlined_call_operand.vmem [shape: f32[1024,128], index: 2, kind: output, shape index: {}]
  %s3 = sld [smem:[#allocation0]]
  $region41: #{simple_net_forward.1} parent=0
    _
  %s5 = ssub.s32 1, %s3
  %s6 = scalar_select 0, %s5, %s3
  loop: start=0, step=1, limit=10
  $region2: #{simple_net_forward.1} parent=0 // loop_pre_header
    _
  $region3: #{simple_net_forward.1} parent=0 // loop_header
    %s8 = sphi 0, %s12
    %p9 = scmp.ge.s32.totalorder %s8, 10
    %s18 = sphi 0, %s20
    %s21 = sphi 0, %s18
    %s22 = sphi 0, %s21
    %s38 = sphi 0, %s22
    %s42 = sphi 0, %s42
    %s44 = sphi 0, %s42
    %s45 = sphi 0, %s44
    %s59 = sphi 0, %s45
    %s65 = sphi 0, %s67
    %s68 = sphi 0, %s65
    %s69 = sphi 0, %s68
    %s85 = sphi 0, %s69
  $region4: #{simple_net_forward.1} parent=0 // loop_header_branch
    %11 = sbr.rel (%p9) target = $region8
  $region5: #{simple_net_forward.1} parent=0 // loop_body
    %s13 = ssub.s32 %s8, 1
    %s14 = ssub.s32 %s8, 2
    %s15 = sadd.s32 %s8, 1
    %s16 = ssub.s32 %s8, %s15
    %p17 = scmp.eq.s32.totalorder %s16, 0
    %s19 = sadd.s32 %s18, 1
    %s20 = scalar_select %p17, %s18, %s19
    %p23 = pneg %p17
    %p24 = scmp.eq.s32.totalorder %s8, 7
    %p25 = por %p23, %p24
    %p26 = scmp.ne.s32.totalorder %s18, %s21
    %p27 = scmp.eq.s32.totalorder %s8, 0
    %p28 = por %p26, %p27
    %p29 = scmp.ne.s32.totalorder %s18, %s21
    %p30 = scmp.eq.s32.totalorder %s13, 7
    %p31 = por %p29, %p30
    %p32 = scmp.ne.s32.totalorder %s21, %s22
    %p33 = scmp.eq.s32.totalorder %s13, 0
    %p34 = por %p32, %p33
    %p35 = scmp.ne.s32.totalorder %s21, %s22
    %p36 = scmp.eq.s32.totalorder %s14, 7
    %p37 = por %p35, %p36
    %p39 = scmp.ne.s32.totalorder %s22, %s38
    %p40 = scmp.eq.s32.totalorder %s14, 0
    %p41 = por %p39, %p40
    %s43 = sadd.s32 %s42, 1
    %p46 = scmp.eq.s32.totalorder %s8, 7
    %p47 = scmp.ne.s32.totalorder %s42, %s44
    %p48 = scmp.eq.s32.totalorder %s8, 0
    %p49 = por %p47, %p48
    %p50 = scmp.ne.s32.totalorder %s42, %s44
    %p51 = scmp.eq.s32.totalorder %s13, 7
    %p52 = por %p50, %p51
    %p53 = scmp.ne.s32.totalorder %s44, %s45
    %p54 = scmp.eq.s32.totalorder %s13, 0
    %p55 = por %p53, %p54
    %p56 = scmp.ne.s32.totalorder %s44, %s45
    %p57 = scmp.eq.s32.totalorder %s14, 7
    %p58 = por %p56, %p57
    %p60 = scmp.ne.s32.totalorder %s45, %s59
    %p61 = scmp.eq.s32.totalorder %s14, 0
    %p62 = por %p60, %p61
    %s63 = ssub.s32 %s8, %s15
    %p64 = scmp.eq.s32.totalorder %s63, 0
    %s66 = sadd.s32 %s65, 1
    %s67 = scalar_select %p64, %s65, %s66
    %p70 = pneg %p64
    %p71 = scmp.eq.s32.totalorder %s8, 7
    %p72 = por %p70, %p71
    %p73 = scmp.ne.s32.totalorder %s65, %s68
    %p74 = scmp.eq.s32.totalorder %s8, 0
    %p75 = por %p73, %p74
    %p76 = scmp.ne.s32.totalorder %s65, %s68
    %p77 = scmp.eq.s32.totalorder %s13, 7
    %p78 = por %p76, %p77
    %p79 = scmp.ne.s32.totalorder %s68, %s69
    %p80 = scmp.eq.s32.totalorder %s13, 0
    %p81 = por %p79, %p80
    %p82 = scmp.ne.s32.totalorder %s68, %s69
    %p83 = scmp.eq.s32.totalorder %s14, 7
    %p84 = por %p82, %p83
    %p86 = scmp.ne.s32.totalorder %s69, %s85
    %p87 = scmp.eq.s32.totalorder %s14, 0
    %p88 = por %p86, %p87
    %p89 = scmp.le.s32.totalorder 1, %s8
    %p90 = scmp.lt.s32.totalorder %s8, 9
    %p91 = pnand %p89, %p90
    %p92 = pneg %p91
    // Predicated region
    $region9: #{simple_net_forward.1} parent=5 // pred_check
      _
    $region10: #{simple_net_forward.1} parent=5 // pred_check_branch
      %94 = sbr.rel (%p91) target = $region12
    $region11: #{simple_net_forward.1} parent=5 // pred_region
      %s95 = ssub.s32 %s8, 1
      // Predicated region
      $region13: #{simple_net_forward.1} parent=11 // pred_check
        %p96 = pneg %p55
      $region14: #{simple_net_forward.1} parent=11 // pred_check_branch
        %98 = sbr.rel (%p96) target = $region16
      $region15: #{simple_net_forward.1} parent=11 // pred_region
        _
      $region16: #{simple_net_forward.1} parent=11 // pred_fallthru
        _
    $region12: #{simple_net_forward.1} parent=5 // pred_fallthru
      _
    %p99 = scmp.lt.s32.totalorder %s8, 8
    // Predicated region
    $region17: #{simple_net_forward.1} parent=5 // pred_check
      %p100 = pneg %p99
    $region18: #{simple_net_forward.1} parent=5 // pred_check_branch
      %102 = sbr.rel (%p100) target = $region20
    $region19: #{simple_net_forward.1} parent=5 // pred_region
      // Predicated region
      $region21: #{simple_net_forward.1} parent=19 // pred_check
        %p103 = pneg %p28
      $region22: #{simple_net_forward.1} parent=19 // pred_check_branch
        %105 = sbr.rel (%p103) target = $region24
      $region23: #{simple_net_forward.1} parent=19 // pred_region
        %s106 = smul.u32 8, %s8
        %p107 = scmp.lt.s32.totalorder %s106, 63
        %s108 = scalar_select %p107, %s106, 63
        %s109 = smul.addr %s108, 16
        %s110 = smul.addr %s109, 4
        %s111 = scalar_lea.vmem %s0, %s110
        %s112 = smul.u32 8, %s8
      $region24: #{simple_net_forward.1} parent=19 // pred_fallthru
        _
    $region20: #{simple_net_forward.1} parent=5 // pred_fallthru
      _
    %p113 = scmp.le.s32.totalorder 1, %s8
    %p114 = scmp.lt.s32.totalorder %s8, 9
    %p115 = pnand %p113, %p114
    %p116 = pneg %p115
    // Predicated region
    $region25: #{simple_net_forward.1} parent=5 // pred_check
      _
    $region26: #{simple_net_forward.1} parent=5 // pred_check_branch
      %118 = sbr.rel (%p115) target = $region28
    $region27: #{simple_net_forward.1} parent=5 // pred_region
      %s119 = ssub.s32 %s8, 1
      %s120 = smul.u32 8, %s13
      %p121 = scmp.lt.s32.totalorder %s120, 63
      %s122 = scalar_select %p121, %s120, 63
      %s123 = smul.addr %s122, 16
      %s124 = smul.addr %s123, 4
      %s125 = scalar_lea.vmem %s0, %s124
      %p126 = pneg %p34
      %p127 = pneg %p31
      %p128 = pneg %p55
      %p129 = pneg %p52
      %p130 = pneg %p81
      %p131 = pneg %p78
      %s132 = smul.u32 16, %s13
      %p133 = scmp.lt.s32.totalorder %s132, 127
      %s134 = scalar_select %p133, %s132, 127
      %s135 = smul.addr %s134, 8
      %s136 = scalar_lea.vmem %s2, %s135
      %s137 = smul.u32 8, %s13
      %p138 = scmp.lt.s32.totalorder %s137, 63
      %s139 = scalar_select %p138, %s137, 63
      %s140 = smul.addr %s139, 16
      %s141 = smul.addr %s140, 4
      %s142 = scalar_lea.vmem %s0, %s141
      %s143 = smul.u32 8, %s13
      %s144 = smul.u32 16, %s13
      %p145 = scmp.lt.s32.totalorder %s144, 127
      %s146 = scalar_select %p145, %s144, 127
      %s147 = smul.addr %s146, 8
      %s148 = scalar_lea.vmem %s2, %s147
      %s149 = smul.u32 16, %s13
      %v151 = vld [vmem:[%s142] sm:$0xf]
      %v152 = vld [vmem:[%s142 + $0x8] sm:$0xf]
      %v153 = vld [vmem:[%s142 + $0x40] sm:$0xf]
      %v154 = vld [vmem:[%s142 + $0x48] sm:$0xf]
      %v155 = vld [vmem:[%s142 + $0x80] sm:$0xf]
      %v156 = vld [vmem:[%s142 + $0x88] sm:$0xf]
      %v157 = vld [vmem:[%s142 + $0xc0] sm:$0xf]
      %v158 = vld [vmem:[%s142 + $0xc8] sm:$0xf]
      %v159 = vld [vmem:[%s142 + $0x100] sm:$0xf]
      %v160 = vld [vmem:[%s142 + $0x108] sm:$0xf]
      %v161 = vld [vmem:[%s142 + $0x140] sm:$0xf]
      %v162 = vld [vmem:[%s142 + $0x148] sm:$0xf]
      %v163 = vld [vmem:[%s142 + $0x180] sm:$0xf]
      %v164 = vld [vmem:[%s142 + $0x188] sm:$0xf]
      %v165 = vld [vmem:[%s142 + $0x1c0] sm:$0xf]
      %v166 = vld [vmem:[%s142 + $0x1c8] sm:$0xf]
      %s167 = scalar_lea.vmem %s142, 16
      %v168 = vld [vmem:[%s167] sm:$0xf]
      %v169 = vld [vmem:[%s167 + $0x8] sm:$0xf]
      %v170 = vld [vmem:[%s167 + $0x40] sm:$0xf]
      %v171 = vld [vmem:[%s167 + $0x48] sm:$0xf]
      %v172 = vld [vmem:[%s167 + $0x80] sm:$0xf]
      %v173 = vld [vmem:[%s167 + $0x88] sm:$0xf]
      %v174 = vld [vmem:[%s167 + $0xc0] sm:$0xf]
      %v175 = vld [vmem:[%s167 + $0xc8] sm:$0xf]
      %v176 = vld [vmem:[%s167 + $0x100] sm:$0xf]
      %v177 = vld [vmem:[%s167 + $0x108] sm:$0xf]
      %v178 = vld [vmem:[%s167 + $0x140] sm:$0xf]
      %v179 = vld [vmem:[%s167 + $0x148] sm:$0xf]
      %v180 = vld [vmem:[%s167 + $0x180] sm:$0xf]
      %v181 = vld [vmem:[%s167 + $0x188] sm:$0xf]
      %v182 = vld [vmem:[%s167 + $0x1c0] sm:$0xf]
      %v183 = vld [vmem:[%s167 + $0x1c8] sm:$0xf]
      %v184 = vld [vmem:[%s142 + $0x4] sm:$0xf]
      %v185 = vld [vmem:[%s142 + $0xc] sm:$0xf]
      %v186 = vld [vmem:[%s142 + $0x44] sm:$0xf]
      %v187 = vld [vmem:[%s142 + $0x4c] sm:$0xf]
      %v188 = vld [vmem:[%s142 + $0x84] sm:$0xf]
      %v189 = vld [vmem:[%s142 + $0x8c] sm:$0xf]
      %v190 = vld [vmem:[%s142 + $0xc4] sm:$0xf]
      %v191 = vld [vmem:[%s142 + $0xcc] sm:$0xf]
      %v192 = vld [vmem:[%s142 + $0x104] sm:$0xf]
      %v193 = vld [vmem:[%s142 + $0x10c] sm:$0xf]
      %v194 = vld [vmem:[%s142 + $0x144] sm:$0xf]
      %v195 = vld [vmem:[%s142 + $0x14c] sm:$0xf]
      %v196 = vld [vmem:[%s142 + $0x184] sm:$0xf]
      %v197 = vld [vmem:[%s142 + $0x18c] sm:$0xf]
      %v198 = vld [vmem:[%s142 + $0x1c4] sm:$0xf]
      %v199 = vld [vmem:[%s142 + $0x1cc] sm:$0xf]
      %v200 = vld [vmem:[%s167 + $0x4] sm:$0xf]
      %v201 = vld [vmem:[%s167 + $0xc] sm:$0xf]
      %v202 = vld [vmem:[%s167 + $0x44] sm:$0xf]
      %v203 = vld [vmem:[%s167 + $0x4c] sm:$0xf]
      %v204 = vld [vmem:[%s167 + $0x84] sm:$0xf]
      %v205 = vld [vmem:[%s167 + $0x8c] sm:$0xf]
      %v206 = vld [vmem:[%s167 + $0xc4] sm:$0xf]
      %v207 = vld [vmem:[%s167 + $0xcc] sm:$0xf]
      %v208 = vld [vmem:[%s167 + $0x104] sm:$0xf]
      %v209 = vld [vmem:[%s167 + $0x10c] sm:$0xf]
      %v210 = vld [vmem:[%s167 + $0x144] sm:$0xf]
      %v211 = vld [vmem:[%s167 + $0x14c] sm:$0xf]
      %v212 = vld [vmem:[%s167 + $0x184] sm:$0xf]
      %v213 = vld [vmem:[%s167 + $0x18c] sm:$0xf]
      %v214 = vld [vmem:[%s167 + $0x1c4] sm:$0xf]
      %v215 = vld [vmem:[%s167 + $0x1cc] sm:$0xf]
      %s216 = scalar_lea.vmem %s142, 32
      %v217 = vld [vmem:[%s216] sm:$0xf]
      %v218 = vld [vmem:[%s216 + $0x8] sm:$0xf]
      %v219 = vld [vmem:[%s216 + $0x40] sm:$0xf]
      %v220 = vld [vmem:[%s216 + $0x48] sm:$0xf]
      %v221 = vld [vmem:[%s216 + $0x80] sm:$0xf]
      %v222 = vld [vmem:[%s216 + $0x88] sm:$0xf]
      %v223 = vld [vmem:[%s216 + $0xc0] sm:$0xf]
      %v224 = vld [vmem:[%s216 + $0xc8] sm:$0xf]
      %v225 = vld [vmem:[%s216 + $0x100] sm:$0xf]
      %v226 = vld [vmem:[%s216 + $0x108] sm:$0xf]
      %v227 = vld [vmem:[%s216 + $0x140] sm:$0xf]
      %v228 = vld [vmem:[%s216 + $0x148] sm:$0xf]
      %v229 = vld [vmem:[%s216 + $0x180] sm:$0xf]
      %v230 = vld [vmem:[%s216 + $0x188] sm:$0xf]
      %v231 = vld [vmem:[%s216 + $0x1c0] sm:$0xf]
      %v232 = vld [vmem:[%s216 + $0x1c8] sm:$0xf]
      %s233 = scalar_lea.vmem %s142, 48
      %v234 = vld [vmem:[%s233] sm:$0xf]
      %v235 = vld [vmem:[%s233 + $0x8] sm:$0xf]
      %v236 = vld [vmem:[%s233 + $0x40] sm:$0xf]
      %v237 = vld [vmem:[%s233 + $0x48] sm:$0xf]
      %v238 = vld [vmem:[%s233 + $0x80] sm:$0xf]
      %v239 = vld [vmem:[%s233 + $0x88] sm:$0xf]
      %v240 = vld [vmem:[%s233 + $0xc0] sm:$0xf]
      %v241 = vld [vmem:[%s233 + $0xc8] sm:$0xf]
      %v242 = vld [vmem:[%s233 + $0x100] sm:$0xf]
      %v243 = vld [vmem:[%s233 + $0x108] sm:$0xf]
      %v244 = vld [vmem:[%s233 + $0x140] sm:$0xf]
      %v245 = vld [vmem:[%s233 + $0x148] sm:$0xf]
      %v246 = vld [vmem:[%s233 + $0x180] sm:$0xf]
      %v247 = vld [vmem:[%s233 + $0x188] sm:$0xf]
      %v248 = vld [vmem:[%s233 + $0x1c0] sm:$0xf]
      %v249 = vld [vmem:[%s233 + $0x1c8] sm:$0xf]
      %v266 = vunpack.c.l.b16 %v151
      %v267 = vunpack.c.l.b16 %v152
      %v268 = vunpack.c.l.b16 %v153
      %v269 = vunpack.c.l.b16 %v154
      %v270 = vunpack.c.l.b16 %v155
      %v271 = vunpack.c.l.b16 %v156
      %v272 = vunpack.c.l.b16 %v157
      %v273 = vunpack.c.l.b16 %v158
      %v274 = vunpack.c.l.b16 %v159
      %v275 = vunpack.c.l.b16 %v160
      %v276 = vunpack.c.l.b16 %v161
      %v277 = vunpack.c.l.b16 %v162
      %v278 = vunpack.c.l.b16 %v163
      %v279 = vunpack.c.l.b16 %v164
      %v280 = vunpack.c.l.b16 %v165
      %v281 = vunpack.c.l.b16 %v166
      %v282 = vpack.c.b16 %v267, %v266
      %v283 = vpack.c.b16 %v269, %v268
      %v284 = vpack.c.b16 %v271, %v270
      %v285 = vpack.c.b16 %v273, %v272
      %v286 = vpack.c.b16 %v275, %v274
      %v287 = vpack.c.b16 %v277, %v276
      %v288 = vpack.c.b16 %v279, %v278
      %v289 = vpack.c.b16 %v281, %v280
      %v306 = vunpack.c.l.b16 %v168
      %v307 = vunpack.c.l.b16 %v169
      %v308 = vunpack.c.l.b16 %v170
      %v309 = vunpack.c.l.b16 %v171
      %v310 = vunpack.c.l.b16 %v172
      %v311 = vunpack.c.l.b16 %v173
      %v312 = vunpack.c.l.b16 %v174
      %v313 = vunpack.c.l.b16 %v175
      %v314 = vunpack.c.l.b16 %v176
      %v315 = vunpack.c.l.b16 %v177
      %v316 = vunpack.c.l.b16 %v178
      %v317 = vunpack.c.l.b16 %v179
      %v318 = vunpack.c.l.b16 %v180
      %v319 = vunpack.c.l.b16 %v181
      %v320 = vunpack.c.l.b16 %v182
      %v321 = vunpack.c.l.b16 %v183
      %v322 = vpack.c.b16 %v307, %v306
      %v323 = vpack.c.b16 %v309, %v308
      %v324 = vpack.c.b16 %v311, %v310
      %v325 = vpack.c.b16 %v313, %v312
      %v326 = vpack.c.b16 %v315, %v314
      %v327 = vpack.c.b16 %v317, %v316
      %v328 = vpack.c.b16 %v319, %v318
      %v329 = vpack.c.b16 %v321, %v320
      %v346 = vunpack.c.l.b16 %v184
      %v347 = vunpack.c.l.b16 %v185
      %v348 = vunpack.c.l.b16 %v186
      %v349 = vunpack.c.l.b16 %v187
      %v350 = vunpack.c.l.b16 %v188
      %v351 = vunpack.c.l.b16 %v189
      %v352 = vunpack.c.l.b16 %v190
      %v353 = vunpack.c.l.b16 %v191
      %v354 = vunpack.c.l.b16 %v192
      %v355 = vunpack.c.l.b16 %v193
      %v356 = vunpack.c.l.b16 %v194
      %v357 = vunpack.c.l.b16 %v195
      %v358 = vunpack.c.l.b16 %v196
      %v359 = vunpack.c.l.b16 %v197
      %v360 = vunpack.c.l.b16 %v198
      %v361 = vunpack.c.l.b16 %v199
      %v362 = vpack.c.b16 %v347, %v346
      %v363 = vpack.c.b16 %v349, %v348
      %v364 = vpack.c.b16 %v351, %v350
      %v365 = vpack.c.b16 %v353, %v352
      %v366 = vpack.c.b16 %v355, %v354
      %v367 = vpack.c.b16 %v357, %v356
      %v368 = vpack.c.b16 %v359, %v358
      %v369 = vpack.c.b16 %v361, %v360
      %370 = vrot.lane.b32.xlu0 %v362, 64
      %v371 = vpop.permute.xlu0 %370
      %372 = vrot.lane.b32.xlu0 %v363, 64
      %v373 = vpop.permute.xlu0 %372
      %374 = vrot.lane.b32.xlu0 %v364, 64
      %v375 = vpop.permute.xlu0 %374
      %376 = vrot.lane.b32.xlu0 %v365, 64
      %v377 = vpop.permute.xlu0 %376
      %378 = vrot.lane.b32.xlu0 %v366, 64
      %v379 = vpop.permute.xlu0 %378
      %380 = vrot.lane.b32.xlu0 %v367, 64
      %v381 = vpop.permute.xlu0 %380
      %382 = vrot.lane.b32.xlu0 %v368, 64
      %v383 = vpop.permute.xlu0 %382
      %384 = vrot.lane.b32.xlu0 %v369, 64
      %v385 = vpop.permute.xlu0 %384
      %v402 = vunpack.c.l.b16 %v200
      %v403 = vunpack.c.l.b16 %v201
      %v404 = vunpack.c.l.b16 %v202
      %v405 = vunpack.c.l.b16 %v203
      %v406 = vunpack.c.l.b16 %v204
      %v407 = vunpack.c.l.b16 %v205
      %v408 = vunpack.c.l.b16 %v206
      %v409 = vunpack.c.l.b16 %v207
      %v410 = vunpack.c.l.b16 %v208
      %v411 = vunpack.c.l.b16 %v209
      %v412 = vunpack.c.l.b16 %v210
      %v413 = vunpack.c.l.b16 %v211
      %v414 = vunpack.c.l.b16 %v212
      %v415 = vunpack.c.l.b16 %v213
      %v416 = vunpack.c.l.b16 %v214
      %v417 = vunpack.c.l.b16 %v215
      %v418 = vpack.c.b16 %v403, %v402
      %v419 = vpack.c.b16 %v405, %v404
      %v420 = vpack.c.b16 %v407, %v406
      %v421 = vpack.c.b16 %v409, %v408
      %v422 = vpack.c.b16 %v411, %v410
      %v423 = vpack.c.b16 %v413, %v412
      %v424 = vpack.c.b16 %v415, %v414
      %v425 = vpack.c.b16 %v417, %v416
      %426 = vrot.lane.b32.xlu0 %v418, 64
      %v427 = vpop.permute.xlu0 %426
      %428 = vrot.lane.b32.xlu0 %v419, 64
      %v429 = vpop.permute.xlu0 %428
      %430 = vrot.lane.b32.xlu0 %v420, 64
      %v431 = vpop.permute.xlu0 %430
      %432 = vrot.lane.b32.xlu0 %v421, 64
      %v433 = vpop.permute.xlu0 %432
      %434 = vrot.lane.b32.xlu0 %v422, 64
      %v435 = vpop.permute.xlu0 %434
      %436 = vrot.lane.b32.xlu0 %v423, 64
      %v437 = vpop.permute.xlu0 %436
      %438 = vrot.lane.b32.xlu0 %v424, 64
      %v439 = vpop.permute.xlu0 %438
      %440 = vrot.lane.b32.xlu0 %v425, 64
      %v441 = vpop.permute.xlu0 %440
      %v458 = vunpack.c.l.b16 %v217
      %v459 = vunpack.c.l.b16 %v218
      %v460 = vunpack.c.l.b16 %v219
      %v461 = vunpack.c.l.b16 %v220
      %v462 = vunpack.c.l.b16 %v221
      %v463 = vunpack.c.l.b16 %v222
      %v464 = vunpack.c.l.b16 %v223
      %v465 = vunpack.c.l.b16 %v224
      %v466 = vunpack.c.l.b16 %v225
      %v467 = vunpack.c.l.b16 %v226
      %v468 = vunpack.c.l.b16 %v227
      %v469 = vunpack.c.l.b16 %v228
      %v470 = vunpack.c.l.b16 %v229
      %v471 = vunpack.c.l.b16 %v230
      %v472 = vunpack.c.l.b16 %v231
      %v473 = vunpack.c.l.b16 %v232
      %v474 = vpack.c.b16 %v459, %v458
      %v475 = vpack.c.b16 %v461, %v460
      %v476 = vpack.c.b16 %v463, %v462
      %v477 = vpack.c.b16 %v465, %v464
      %v478 = vpack.c.b16 %v467, %v466
      %v479 = vpack.c.b16 %v469, %v468
      %v480 = vpack.c.b16 %v471, %v470
      %v481 = vpack.c.b16 %v473, %v472
      %v498 = vunpack.c.l.b16 %v234
      %v499 = vunpack.c.l.b16 %v235
      %v500 = vunpack.c.l.b16 %v236
      %v501 = vunpack.c.l.b16 %v237
      %v502 = vunpack.c.l.b16 %v238
      %v503 = vunpack.c.l.b16 %v239
      %v504 = vunpack.c.l.b16 %v240
      %v505 = vunpack.c.l.b16 %v241
      %v506 = vunpack.c.l.b16 %v242
      %v507 = vunpack.c.l.b16 %v243
      %v508 = vunpack.c.l.b16 %v244
      %v509 = vunpack.c.l.b16 %v245
      %v510 = vunpack.c.l.b16 %v246
      %v511 = vunpack.c.l.b16 %v247
      %v512 = vunpack.c.l.b16 %v248
      %v513 = vunpack.c.l.b16 %v249
      %v514 = vpack.c.b16 %v499, %v498
      %v515 = vpack.c.b16 %v501, %v500
      %v516 = vpack.c.b16 %v503, %v502
      %v517 = vpack.c.b16 %v505, %v504
      %v518 = vpack.c.b16 %v507, %v506
      %v519 = vpack.c.b16 %v509, %v508
      %v520 = vpack.c.b16 %v511, %v510
      %v521 = vpack.c.b16 %v513, %v512
      %vm522 = vcmask 523264
      %v541 = vsel %vm522, %v322, %v371
      %v545 = vsel %vm522, %v323, %v373
      %v549 = vsel %vm522, %v324, %v375
      %v553 = vsel %vm522, %v325, %v377
      %v557 = vsel %vm522, %v326, %v379
      %v561 = vsel %vm522, %v327, %v381
      %v565 = vsel %vm522, %v328, %v383
      %v569 = vsel %vm522, %v329, %v385
      %v572 = vsel %vm522, %v371, %v427
      %v575 = vsel %vm522, %v373, %v429
      %v578 = vsel %vm522, %v375, %v431
      %v581 = vsel %vm522, %v377, %v433
      %v584 = vsel %vm522, %v379, %v435
      %v587 = vsel %vm522, %v381, %v437
      %v590 = vsel %vm522, %v383, %v439
      %v593 = vsel %vm522, %v385, %v441
      %v611 = vld [vmem:[%s1] sm:$0xf]
      %v612 = vld [vmem:[%s1 + $0x4] sm:$0xf]
      %v613 = vld [vmem:[%s1 + $0x8] sm:$0xf]
      %v614 = vld [vmem:[%s1 + $0xc] sm:$0xf]
      %v615 = vld [vmem:[%s1 + $0x10] sm:$0xf]
      %v616 = vld [vmem:[%s1 + $0x14] sm:$0xf]
      %v617 = vld [vmem:[%s1 + $0x18] sm:$0xf]
      %v618 = vld [vmem:[%s1 + $0x1c] sm:$0xf]
      %v619 = vld [vmem:[%s1 + $0x20] sm:$0xf]
      %v620 = vld [vmem:[%s1 + $0x24] sm:$0xf]
      %v621 = vld [vmem:[%s1 + $0x28] sm:$0xf]
      %v622 = vld [vmem:[%s1 + $0x2c] sm:$0xf]
      %v623 = vld [vmem:[%s1 + $0x30] sm:$0xf]
      %v624 = vld [vmem:[%s1 + $0x34] sm:$0xf]
      %v625 = vld [vmem:[%s1 + $0x38] sm:$0xf]
      %v626 = vld [vmem:[%s1 + $0x3c] sm:$0xf]
      %v627 = vld [vmem:[%s1 + $0x40] sm:$0xf]
      %v628 = vld [vmem:[%s1 + $0x44] sm:$0xf]
      %v629 = vld [vmem:[%s1 + $0x48] sm:$0xf]
      %v630 = vld [vmem:[%s1 + $0x4c] sm:$0xf]
      %v631 = vld [vmem:[%s1 + $0x50] sm:$0xf]
      %v632 = vld [vmem:[%s1 + $0x54] sm:$0xf]
      %v633 = vld [vmem:[%s1 + $0x58] sm:$0xf]
      %v634 = vld [vmem:[%s1 + $0x5c] sm:$0xf]
      %v635 = vld [vmem:[%s1 + $0x60] sm:$0xf]
      %v636 = vld [vmem:[%s1 + $0x64] sm:$0xf]
      %v637 = vld [vmem:[%s1 + $0x68] sm:$0xf]
      %v638 = vld [vmem:[%s1 + $0x6c] sm:$0xf]
      %v639 = vld [vmem:[%s1 + $0x70] sm:$0xf]
      %v640 = vld [vmem:[%s1 + $0x74] sm:$0xf]
      %v641 = vld [vmem:[%s1 + $0x78] sm:$0xf]
      %v642 = vld [vmem:[%s1 + $0x7c] sm:$0xf]
      %v643 = vld [vmem:[%s1 + $0x80] sm:$0xf]
      %v644 = vld [vmem:[%s1 + $0x84] sm:$0xf]
      %v645 = vld [vmem:[%s1 + $0x88] sm:$0xf]
      %v646 = vld [vmem:[%s1 + $0x8c] sm:$0xf]
      %v647 = vld [vmem:[%s1 + $0x90] sm:$0xf]
      %v648 = vld [vmem:[%s1 + $0x94] sm:$0xf]
      %v649 = vld [vmem:[%s1 + $0x98] sm:$0xf]
      %v650 = vld [vmem:[%s1 + $0x9c] sm:$0xf]
      %v651 = vld [vmem:[%s1 + $0xa0] sm:$0xf]
      %v652 = vld [vmem:[%s1 + $0xa4] sm:$0xf]
      %v653 = vld [vmem:[%s1 + $0xa8] sm:$0xf]
      %v654 = vld [vmem:[%s1 + $0xac] sm:$0xf]
      %v655 = vld [vmem:[%s1 + $0xb0] sm:$0xf]
      %v656 = vld [vmem:[%s1 + $0xb4] sm:$0xf]
      %v657 = vld [vmem:[%s1 + $0xb8] sm:$0xf]
      %v658 = vld [vmem:[%s1 + $0xbc] sm:$0xf]
      %v659 = vld [vmem:[%s1 + $0xc0] sm:$0xf]
      %v660 = vld [vmem:[%s1 + $0xc4] sm:$0xf]
      %v661 = vld [vmem:[%s1 + $0xc8] sm:$0xf]
      %v662 = vld [vmem:[%s1 + $0xcc] sm:$0xf]
      %v663 = vld [vmem:[%s1 + $0xd0] sm:$0xf]
      %v664 = vld [vmem:[%s1 + $0xd4] sm:$0xf]
      %v665 = vld [vmem:[%s1 + $0xd8] sm:$0xf]
      %v666 = vld [vmem:[%s1 + $0xdc] sm:$0xf]
      %v667 = vld [vmem:[%s1 + $0xe0] sm:$0xf]
      %v668 = vld [vmem:[%s1 + $0xe4] sm:$0xf]
      %v669 = vld [vmem:[%s1 + $0xe8] sm:$0xf]
      %v670 = vld [vmem:[%s1 + $0xec] sm:$0xf]
      %v671 = vld [vmem:[%s1 + $0xf0] sm:$0xf]
      %v672 = vld [vmem:[%s1 + $0xf4] sm:$0xf]
      %v673 = vld [vmem:[%s1 + $0xf8] sm:$0xf]
      %v674 = vld [vmem:[%s1 + $0xfc] sm:$0xf]
      %v675 = vld [vmem:[%s1 + $0x100] sm:$0xf]
      %v676 = vld [vmem:[%s1 + $0x104] sm:$0xf]
      %v677 = vld [vmem:[%s1 + $0x108] sm:$0xf]
      %v678 = vld [vmem:[%s1 + $0x10c] sm:$0xf]
      %v679 = vld [vmem:[%s1 + $0x110] sm:$0xf]
      %v680 = vld [vmem:[%s1 + $0x114] sm:$0xf]
      %v681 = vld [vmem:[%s1 + $0x118] sm:$0xf]
      %v682 = vld [vmem:[%s1 + $0x11c] sm:$0xf]
      %v755 = vunpack.c.l.b16 %v611
      %v756 = vunpack.c.l.b16 %v612
      %v757 = vunpack.c.l.b16 %v613
      %v758 = vunpack.c.l.b16 %v614
      %v759 = vunpack.c.l.b16 %v615
      %v760 = vunpack.c.l.b16 %v616
      %v761 = vunpack.c.l.b16 %v617
      %v762 = vunpack.c.l.b16 %v618
      %v763 = vunpack.c.l.b16 %v619
      %v764 = vunpack.c.l.b16 %v620
      %v765 = vunpack.c.l.b16 %v621
      %v766 = vunpack.c.l.b16 %v622
      %v767 = vunpack.c.l.b16 %v623
      %v768 = vunpack.c.l.b16 %v624
      %v769 = vunpack.c.l.b16 %v625
      %v770 = vunpack.c.l.b16 %v626
      %v771 = vunpack.c.l.b16 %v627
      %v772 = vunpack.c.l.b16 %v628
      %v773 = vunpack.c.l.b16 %v629
      %v774 = vunpack.c.l.b16 %v630
      %v775 = vunpack.c.l.b16 %v631
      %v776 = vunpack.c.l.b16 %v632
      %v777 = vunpack.c.l.b16 %v633
      %v778 = vunpack.c.l.b16 %v634
      %v779 = vunpack.c.l.b16 %v635
      %v780 = vunpack.c.l.b16 %v636
      %v781 = vunpack.c.l.b16 %v637
      %v782 = vunpack.c.l.b16 %v638
      %v783 = vunpack.c.l.b16 %v639
      %v784 = vunpack.c.l.b16 %v640
      %v785 = vunpack.c.l.b16 %v641
      %v786 = vunpack.c.l.b16 %v642
      %v787 = vunpack.c.l.b16 %v643
      %v788 = vunpack.c.l.b16 %v644
      %v789 = vunpack.c.l.b16 %v645
      %v790 = vunpack.c.l.b16 %v646
      %v791 = vunpack.c.l.b16 %v647
      %v792 = vunpack.c.l.b16 %v648
      %v793 = vunpack.c.l.b16 %v649
      %v794 = vunpack.c.l.b16 %v650
      %v795 = vunpack.c.l.b16 %v651
      %v796 = vunpack.c.l.b16 %v652
      %v797 = vunpack.c.l.b16 %v653
      %v798 = vunpack.c.l.b16 %v654
      %v799 = vunpack.c.l.b16 %v655
      %v800 = vunpack.c.l.b16 %v656
      %v801 = vunpack.c.l.b16 %v657
      %v802 = vunpack.c.l.b16 %v658
      %v803 = vunpack.c.l.b16 %v659
      %v804 = vunpack.c.l.b16 %v660
      %v805 = vunpack.c.l.b16 %v661
      %v806 = vunpack.c.l.b16 %v662
      %v807 = vunpack.c.l.b16 %v663
      %v808 = vunpack.c.l.b16 %v664
      %v809 = vunpack.c.l.b16 %v665
      %v810 = vunpack.c.l.b16 %v666
      %v811 = vunpack.c.l.b16 %v667
      %v812 = vunpack.c.l.b16 %v668
      %v813 = vunpack.c.l.b16 %v669
      %v814 = vunpack.c.l.b16 %v670
      %v815 = vunpack.c.l.b16 %v671
      %v816 = vunpack.c.l.b16 %v672
      %v817 = vunpack.c.l.b16 %v673
      %v818 = vunpack.c.l.b16 %v674
      %v819 = vunpack.c.l.b16 %v675
      %v820 = vunpack.c.l.b16 %v676
      %v821 = vunpack.c.l.b16 %v677
      %v822 = vunpack.c.l.b16 %v678
      %v823 = vunpack.c.l.b16 %v679
      %v824 = vunpack.c.l.b16 %v680
      %v825 = vunpack.c.l.b16 %v681
      %v826 = vunpack.c.l.b16 %v682
      %v827 = vpack.c.b16 %v756, %v755
      %v828 = vpack.c.b16 %v758, %v757
      %v829 = vpack.c.b16 %v760, %v759
      %v830 = vpack.c.b16 %v762, %v761
      %v831 = vpack.c.b16 %v764, %v763
      %v832 = vpack.c.b16 %v766, %v765
      %v833 = vpack.c.b16 %v768, %v767
      %v834 = vpack.c.b16 %v770, %v769
      %v835 = vpack.c.b16 %v772, %v771
      %v836 = vpack.c.b16 %v774, %v773
      %v837 = vpack.c.b16 %v776, %v775
      %v838 = vpack.c.b16 %v778, %v777
      %v839 = vpack.c.b16 %v780, %v779
      %v840 = vpack.c.b16 %v782, %v781
      %v841 = vpack.c.b16 %v784, %v783
      %v842 = vpack.c.b16 %v786, %v785
      %v843 = vpack.c.b16 %v788, %v787
      %v844 = vpack.c.b16 %v790, %v789
      %v845 = vpack.c.b16 %v792, %v791
      %v846 = vpack.c.b16 %v794, %v793
      %v847 = vpack.c.b16 %v796, %v795
      %v848 = vpack.c.b16 %v798, %v797
      %v849 = vpack.c.b16 %v800, %v799
      %v850 = vpack.c.b16 %v802, %v801
      %v851 = vpack.c.b16 %v804, %v803
      %v852 = vpack.c.b16 %v806, %v805
      %v853 = vpack.c.b16 %v808, %v807
      %v854 = vpack.c.b16 %v810, %v809
      %v855 = vpack.c.b16 %v812, %v811
      %v856 = vpack.c.b16 %v814, %v813
      %v857 = vpack.c.b16 %v816, %v815
      %v858 = vpack.c.b16 %v818, %v817
      %v859 = vpack.c.b16 %v820, %v819
      %v860 = vpack.c.b16 %v822, %v821
      %v861 = vpack.c.b16 %v824, %v823
      %v862 = vpack.c.b16 %v826, %v825
      %v900 = vsel %vm522, %v514, 0
      %v903 = vsel %vm522, %v515, 0
      %v906 = vsel %vm522, %v516, 0
      %v909 = vsel %vm522, %v517, 0
      %v912 = vsel %vm522, %v518, 0
      %v915 = vsel %vm522, %v519, 0
      %v918 = vsel %vm522, %v520, 0
      %v921 = vsel %vm522, %v521, 0
      %923 = vmatprep.subr.bf16.mxu0 0
      %924 = vmatpush1.bf16.msra.mxu0 %v827
      %925 = vmatprep.subr.bf16.mxu0 0
      %926 = vmatpush1.bf16.msra.mxu0 %v828
      %927 = vmatprep.subr.bf16.mxu0 0
      %928 = vmatpush1.bf16.msra.mxu0 %v829
      %929 = vmatprep.subr.bf16.mxu0 0
      %930 = vmatpush1.bf16.msra.mxu0 %v830
      %931 = vmatprep.subr.bf16.mxu0 0
      %932 = vmatpush1.bf16.msra.mxu0 %v831
      %933 = vmatprep.subr.bf16.mxu0 0
      %934 = vmatpush1.bf16.msra.mxu0 %v832
      %935 = vmatprep.subr.bf16.mxu0 0
      %936 = vmatpush1.bf16.msra.mxu0 %v833
      %937 = vmatprep.subr.bf16.mxu0 0
      %938 = vmatpush1.bf16.msra.mxu0 %v834
      %939 = vmatprep.subr.bf16.mxu0 0
      %940 = vmatpush1.bf16.msra.mxu0 %v835
      %941 = vmatprep.subr.bf16.mxu0 0
      %942 = vmatpush1.bf16.msra.mxu0 %v836
      %943 = vmatprep.subr.bf16.mxu0 0
      %944 = vmatpush1.bf16.msra.mxu0 %v837
      %945 = vmatprep.subr.bf16.mxu0 0
      %946 = vmatpush1.bf16.msra.mxu0 %v838
      %947 = vmatprep.subr.bf16.mxu0 0
      %948 = vmatpush1.bf16.msra.mxu0 %v839
      %949 = vmatprep.subr.bf16.mxu0 0
      %950 = vmatpush1.bf16.msra.mxu0 %v840
      %951 = vmatprep.subr.bf16.mxu0 0
      %952 = vmatpush1.bf16.msra.mxu0 %v841
      %953 = vmatprep.subr.bf16.mxu0 0
      %954 = vmatpush1.bf16.msra.mxu0 %v842
      %955 = vmatprep.mubr.bf16.mxu0 %v541
      %956 = vmatmul.mubr.bf16.gmra.mrb[0].mxu0 %v282
      %v957 = vpop.f32.mrb[0].mxu0
      %v958 = vadd.f32 0.0, %v957
      %v959 = vpop.f32.mrb[0].mxu0
      %v960 = vpop.f32.mrb[0].mxu0
      %v961 = vadd.f32 0.0, %v960
      %v962 = vpop.f32.mrb[0].mxu0
      %963 = vmatprep.mubr.bf16.mxu0 %v545
      %964 = vmatmul.mubr.bf16.gmra.mrb[0].mxu0 %v283
      %v965 = vpop.f32.mrb[0].mxu0
      %v966 = vadd.f32 0.0, %v965
      %v967 = vpop.f32.mrb[0].mxu0
      %v968 = vpop.f32.mrb[0].mxu0
      %v969 = vadd.f32 0.0, %v968
      %v970 = vpop.f32.mrb[0].mxu0
      %971 = vmatprep.mubr.bf16.mxu0 %v549
      %972 = vmatmul.mubr.bf16.gmra.mrb[0].mxu0 %v284
      %v973 = vpop.f32.mrb[0].mxu0
      %v974 = vadd.f32 0.0, %v973
      %v975 = vpop.f32.mrb[0].mxu0
      %v976 = vpop.f32.mrb[0].mxu0
      %v977 = vadd.f32 0.0, %v976
      %v978 = vpop.f32.mrb[0].mxu0
      %979 = vmatprep.mubr.bf16.mxu0 %v553
      %980 = vmatmul.mubr.bf16.gmra.mrb[0].mxu0 %v285
      %v981 = vpop.f32.mrb[0].mxu0
      %v982 = vadd.f32 0.0, %v981
      %v983 = vpop.f32.mrb[0].mxu0
      %v984 = vpop.f32.mrb[0].mxu0
      %v985 = vadd.f32 0.0, %v984
      %v986 = vpop.f32.mrb[0].mxu0
      %987 = vmatprep.mubr.bf16.mxu0 %v557
      %988 = vmatmul.mubr.bf16.gmra.mrb[0].mxu0 %v286
      %v989 = vpop.f32.mrb[0].mxu0
      %v990 = vadd.f32 0.0, %v989
      %v991 = vpop.f32.mrb[0].mxu0
      %v992 = vpop.f32.mrb[0].mxu0
      %v993 = vadd.f32 0.0, %v992
      %v994 = vpop.f32.mrb[0].mxu0
      %995 = vmatprep.mubr.bf16.mxu0 %v561
      %996 = vmatmul.mubr.bf16.gmra.mrb[0].mxu0 %v287
      %v997 = vpop.f32.mrb[0].mxu0
      %v998 = vadd.f32 0.0, %v997
      %v999 = vpop.f32.mrb[0].mxu0
      %v1000 = vpop.f32.mrb[0].mxu0
      %v1001 = vadd.f32 0.0, %v1000
      %v1002 = vpop.f32.mrb[0].mxu0
      %1003 = vmatprep.mubr.bf16.mxu0 %v565
      %1004 = vmatmul.mubr.bf16.gmra.mrb[0].mxu0 %v288
      %v1005 = vpop.f32.mrb[0].mxu0
      %v1006 = vadd.f32 0.0, %v1005
      %v1007 = vpop.f32.mrb[0].mxu0
      %v1008 = vpop.f32.mrb[0].mxu0
      %v1009 = vadd.f32 0.0, %v1008
      %v1010 = vpop.f32.mrb[0].mxu0
      %1011 = vmatprep.mubr.bf16.mxu0 %v569
      %1012 = vmatmul.mubr.bf16.gmra.mrb[0].mxu0 %v289
      %v1013 = vpop.f32.mrb[0].mxu0
      %v1014 = vadd.f32 0.0, %v1013
      %v1015 = vpop.f32.mrb[0].mxu0
      %v1016 = vpop.f32.mrb[0].mxu0
      %v1017 = vadd.f32 0.0, %v1016
      %v1018 = vpop.f32.mrb[0].mxu0
      %1019 = vdwg.mxu0
      %1020 = vmatprep.subr.bf16.mxu0 0
      %1021 = vmatpush1.bf16.msra.mxu0 %v843
      %1022 = vmatprep.subr.bf16.mxu0 0
      %1023 = vmatpush1.bf16.msra.mxu0 %v844
      %1024 = vmatprep.subr.bf16.mxu0 0
      %1025 = vmatpush1.bf16.msra.mxu0 %v845
      %1026 = vmatprep.subr.bf16.mxu0 0
      %1027 = vmatpush1.bf16.msra.mxu0 %v846
      %1028 = vmatprep.subr.bf16.mxu0 0
      %1029 = vmatpush1.bf16.msra.mxu0 %v847
      %1030 = vmatprep.subr.bf16.mxu0 0
      %1031 = vmatpush1.bf16.msra.mxu0 %v848
      %1032 = vmatprep.subr.bf16.mxu0 0
      %1033 = vmatpush1.bf16.msra.mxu0 %v849
      %1034 = vmatprep.subr.bf16.mxu0 0
      %1035 = vmatpush1.bf16.msra.mxu0 %v850
      %1036 = vmatprep.subr.bf16.mxu0 0
      %1037 = vmatpush1.bf16.msra.mxu0 %v851
      %1038 = vmatprep.subr.bf16.mxu0 0
      %1039 = vmatpush1.bf16.msra.mxu0 %v852
      %1040 = vmatprep.subr.bf16.mxu0 0
      %1041 = vmatpush1.bf16.msra.mxu0 %v853
      %1042 = vmatprep.subr.bf16.mxu0 0
      %1043 = vmatpush1.bf16.msra.mxu0 %v854
      %1044 = vmatprep.subr.bf16.mxu0 0
      %1045 = vmatpush1.bf16.msra.mxu0 %v855
      %1046 = vmatprep.subr.bf16.mxu0 0
      %1047 = vmatpush1.bf16.msra.mxu0 %v856
      %1048 = vmatprep.subr.bf16.mxu0 0
      %1049 = vmatpush1.bf16.msra.mxu0 %v857
      %1050 = vmatprep.subr.bf16.mxu0 0
      %1051 = vmatpush1.bf16.msra.mxu0 %v858
      %1052 = vmatprep.mubr.bf16.mxu0 %v474
      %1053 = vmatmul.mubr.bf16.gmra.mrb[0].mxu0 %v572
      %v1054 = vpop.f32.mrb[0].mxu0
      %v1055 = vadd.f32 %v958, %v1054
      %v1056 = vpop.f32.mrb[0].mxu0
      %v1057 = vpop.f32.mrb[0].mxu0
      %v1058 = vadd.f32 %v961, %v1057
      %v1059 = vpop.f32.mrb[0].mxu0
      %1060 = vmatprep.mubr.bf16.mxu0 %v475
      %1061 = vmatmul.mubr.bf16.gmra.mrb[0].mxu0 %v575
      %v1062 = vpop.f32.mrb[0].mxu0
      %v1063 = vadd.f32 %v966, %v1062
      %v1064 = vpop.f32.mrb[0].mxu0
      %v1065 = vpop.f32.mrb[0].mxu0
      %v1066 = vadd.f32 %v969, %v1065
      %v1067 = vpop.f32.mrb[0].mxu0
      %1068 = vmatprep.mubr.bf16.mxu0 %v476
      %1069 = vmatmul.mubr.bf16.gmra.mrb[0].mxu0 %v578
      %v1070 = vpop.f32.mrb[0].mxu0
      %v1071 = vadd.f32 %v974, %v1070
      %v1072 = vpop.f32.mrb[0].mxu0
      %v1073 = vpop.f32.mrb[0].mxu0
      %v1074 = vadd.f32 %v977, %v1073
      %v1075 = vpop.f32.mrb[0].mxu0
      %1076 = vmatprep.mubr.bf16.mxu0 %v477
      %1077 = vmatmul.mubr.bf16.gmra.mrb[0].mxu0 %v581
      %v1078 = vpop.f32.mrb[0].mxu0
      %v1079 = vadd.f32 %v982, %v1078
      %v1080 = vpop.f32.mrb[0].mxu0
      %v1081 = vpop.f32.mrb[0].mxu0
      %v1082 = vadd.f32 %v985, %v1081
      %v1083 = vpop.f32.mrb[0].mxu0
      %1084 = vmatprep.mubr.bf16.mxu0 %v478
      %1085 = vmatmul.mubr.bf16.gmra.mrb[0].mxu0 %v584
      %v1086 = vpop.f32.mrb[0].mxu0
      %v1087 = vadd.f32 %v990, %v1086
      %v1088 = vpop.f32.mrb[0].mxu0
      %v1089 = vpop.f32.mrb[0].mxu0
      %v1090 = vadd.f32 %v993, %v1089
      %v1091 = vpop.f32.mrb[0].mxu0
      %1092 = vmatprep.mubr.bf16.mxu0 %v479
      %1093 = vmatmul.mubr.bf16.gmra.mrb[0].mxu0 %v587
      %v1094 = vpop.f32.mrb[0].mxu0
      %v1095 = vadd.f32 %v998, %v1094
      %v1096 = vpop.f32.mrb[0].mxu0
      %v1097 = vpop.f32.mrb[0].mxu0
      %v1098 = vadd.f32 %v1001, %v1097
      %v1099 = vpop.f32.mrb[0].mxu0
      %1100 = vmatprep.mubr.bf16.mxu0 %v480
      %1101 = vmatmul.mubr.bf16.gmra.mrb[0].mxu0 %v590
      %v1102 = vpop.f32.mrb[0].mxu0
      %v1103 = vadd.f32 %v1006, %v1102
      %v1104 = vpop.f32.mrb[0].mxu0
      %v1105 = vpop.f32.mrb[0].mxu0
      %v1106 = vadd.f32 %v1009, %v1105
      %v1107 = vpop.f32.mrb[0].mxu0
      %1108 = vmatprep.mubr.bf16.mxu0 %v481
      %1109 = vmatmul.mubr.bf16.gmra.mrb[0].mxu0 %v593
      %v1110 = vpop.f32.mrb[0].mxu0
      %v1111 = vadd.f32 %v1014, %v1110
      %v1112 = vpop.f32.mrb[0].mxu0
      %v1113 = vpop.f32.mrb[0].mxu0
      %v1114 = vadd.f32 %v1017, %v1113
      %v1115 = vpop.f32.mrb[0].mxu0
      %1116 = vdwg.mxu0
      %1117 = vmatprep.subr.bf16.mxu0 0
      %1118 = vmatpush1.bf16.msra.mxu0 %v859
      %1119 = vmatprep.subr.bf16.mxu0 0
      %1120 = vmatpush1.bf16.msra.mxu0 %v860
      %1121 = vmatprep.subr.bf16.mxu0 0
      %1122 = vmatpush1.bf16.msra.mxu0 %v861
      %1123 = vmatprep.subr.bf16.mxu0 0
      %1124 = vmatpush1.bf16.msra.mxu0 %v862
      %1125 = vmatprep.subr.bf16.mxu0 0
      %1126 = vmatpush1.bf16.msra.mxu0 0
      %1127 = vmatprep.subr.bf16.mxu0 0
      %1128 = vmatpush1.bf16.msra.mxu0 0
      %1129 = vmatprep.subr.bf16.mxu0 0
      %1130 = vmatpush1.bf16.msra.mxu0 0
      %1131 = vmatprep.subr.bf16.mxu0 0
      %1132 = vmatpush1.bf16.msra.mxu0 0
      %1133 = vmatprep.subr.bf16.mxu0 0
      %1134 = vmatpush1.bf16.msra.mxu0 0
      %1135 = vmatprep.subr.bf16.mxu0 0
      %1136 = vmatpush1.bf16.msra.mxu0 0
      %1137 = vmatprep.subr.bf16.mxu0 0
      %1138 = vmatpush1.bf16.msra.mxu0 0
      %1139 = vmatprep.subr.bf16.mxu0 0
      %1140 = vmatpush1.bf16.msra.mxu0 0
      %1141 = vmatprep.subr.bf16.mxu0 0
      %1142 = vmatpush1.bf16.msra.mxu0 0
      %1143 = vmatprep.subr.bf16.mxu0 0
      %1144 = vmatpush1.bf16.msra.mxu0 0
      %1145 = vmatprep.subr.bf16.mxu0 0
      %1146 = vmatpush1.bf16.msra.mxu0 0
      %1147 = vmatprep.subr.bf16.mxu0 0
      %1148 = vmatpush1.bf16.msra.mxu0 0
      %1149 = vmatprep.mubr.bf16.mxu0 0
      %1150 = vmatmul.mubr.bf16.gmra.mrb[0].mxu0 %v900
      %v1151 = vpop.f32.mrb[0].mxu0
      %v1152 = vadd.f32 %v1055, %v1151
      %v1153 = vpop.f32.mrb[0].mxu0
      %v1154 = vpop.f32.mrb[0].mxu0
      %v1155 = vadd.f32 %v1058, %v1154
      %v1156 = vpop.f32.mrb[0].mxu0
      %1157 = vmatprep.mubr.bf16.mxu0 0
      %1158 = vmatmul.mubr.bf16.gmra.mrb[0].mxu0 %v903
      %v1159 = vpop.f32.mrb[0].mxu0
      %v1160 = vadd.f32 %v1063, %v1159
      %v1161 = vpop.f32.mrb[0].mxu0
      %v1162 = vpop.f32.mrb[0].mxu0
      %v1163 = vadd.f32 %v1066, %v1162
      %v1164 = vpop.f32.mrb[0].mxu0
      %1165 = vmatprep.mubr.bf16.mxu0 0
      %1166 = vmatmul.mubr.bf16.gmra.mrb[0].mxu0 %v906
      %v1167 = vpop.f32.mrb[0].mxu0
      %v1168 = vadd.f32 %v1071, %v1167
      %v1169 = vpop.f32.mrb[0].mxu0
      %v1170 = vpop.f32.mrb[0].mxu0
      %v1171 = vadd.f32 %v1074, %v1170
      %v1172 = vpop.f32.mrb[0].mxu0
      %1173 = vmatprep.mubr.bf16.mxu0 0
      %1174 = vmatmul.mubr.bf16.gmra.mrb[0].mxu0 %v909
      %v1175 = vpop.f32.mrb[0].mxu0
      %v1176 = vadd.f32 %v1079, %v1175
      %v1177 = vpop.f32.mrb[0].mxu0
      %v1178 = vpop.f32.mrb[0].mxu0
      %v1179 = vadd.f32 %v1082, %v1178
      %v1180 = vpop.f32.mrb[0].mxu0
      %1181 = vmatprep.mubr.bf16.mxu0 0
      %1182 = vmatmul.mubr.bf16.gmra.mrb[0].mxu0 %v912
      %v1183 = vpop.f32.mrb[0].mxu0
      %v1184 = vadd.f32 %v1087, %v1183
      %v1185 = vpop.f32.mrb[0].mxu0
      %v1186 = vpop.f32.mrb[0].mxu0
      %v1187 = vadd.f32 %v1090, %v1186
      %v1188 = vpop.f32.mrb[0].mxu0
      %1189 = vmatprep.mubr.bf16.mxu0 0
      %1190 = vmatmul.mubr.bf16.gmra.mrb[0].mxu0 %v915
      %v1191 = vpop.f32.mrb[0].mxu0
      %v1192 = vadd.f32 %v1095, %v1191
      %v1193 = vpop.f32.mrb[0].mxu0
      %v1194 = vpop.f32.mrb[0].mxu0
      %v1195 = vadd.f32 %v1098, %v1194
      %v1196 = vpop.f32.mrb[0].mxu0
      %1197 = vmatprep.mubr.bf16.mxu0 0
      %1198 = vmatmul.mubr.bf16.gmra.mrb[0].mxu0 %v918
      %v1199 = vpop.f32.mrb[0].mxu0
      %v1200 = vadd.f32 %v1103, %v1199
      %v1201 = vpop.f32.mrb[0].mxu0
      %v1202 = vpop.f32.mrb[0].mxu0
      %v1203 = vadd.f32 %v1106, %v1202
      %v1204 = vpop.f32.mrb[0].mxu0
      %1205 = vmatprep.mubr.bf16.mxu0 0
      %1206 = vmatmul.mubr.bf16.gmra.mrb[0].mxu0 %v921
      %v1207 = vpop.f32.mrb[0].mxu0
      %v1208 = vadd.f32 %v1111, %v1207
      %v1209 = vpop.f32.mrb[0].mxu0
      %v1210 = vpop.f32.mrb[0].mxu0
      %v1211 = vadd.f32 %v1114, %v1210
      %v1212 = vpop.f32.mrb[0].mxu0
      %1213 = vdwg.mxu0
      %1214 = vst [vmem:[%s148] sm:$0xff] %v1152
      %1215 = vst [vmem:[%s148 + $0x8] sm:$0xff] %v1155
      %1216 = vst [vmem:[%s148 + $0x10] sm:$0xff] %v1160
      %1217 = vst [vmem:[%s148 + $0x18] sm:$0xff] %v1163
      %1218 = vst [vmem:[%s148 + $0x20] sm:$0xff] %v1168
      %1219 = vst [vmem:[%s148 + $0x28] sm:$0xff] %v1171
      %1220 = vst [vmem:[%s148 + $0x30] sm:$0xff] %v1176
      %1221 = vst [vmem:[%s148 + $0x38] sm:$0xff] %v1179
      %1222 = vst [vmem:[%s148 + $0x40] sm:$0xff] %v1184
      %1223 = vst [vmem:[%s148 + $0x48] sm:$0xff] %v1187
      %1224 = vst [vmem:[%s148 + $0x50] sm:$0xff] %v1192
      %1225 = vst [vmem:[%s148 + $0x58] sm:$0xff] %v1195
      %1226 = vst [vmem:[%s148 + $0x60] sm:$0xff] %v1200
      %1227 = vst [vmem:[%s148 + $0x68] sm:$0xff] %v1203
      %1228 = vst [vmem:[%s148 + $0x70] sm:$0xff] %v1208
      %1229 = vst [vmem:[%s148 + $0x78] sm:$0xff] %v1211
      %s1230 = smul.u32 16, %s13
      %p1231 = scmp.lt.s32.totalorder %s1230, 127
      %s1232 = scalar_select %p1231, %s1230, 127
      %s1233 = smul.addr %s1232, 8
      %s1234 = scalar_lea.vmem %s2, %s1233
      // Predicated region
      $region29: #{simple_net_forward.1} parent=27 // pred_check
        %p1235 = pneg %p78
      $region30: #{simple_net_forward.1} parent=27 // pred_check_branch
        %1237 = sbr.rel (%p1235) target = $region32
      $region31: #{simple_net_forward.1} parent=27 // pred_region
        %s1238 = smul.u32 16, %s13
      $region32: #{simple_net_forward.1} parent=27 // pred_fallthru
        _
    $region28: #{simple_net_forward.1} parent=5 // pred_fallthru
      _
    %p1239 = scmp.le.s32.totalorder 2, %s8
    // Predicated region
    $region33: #{simple_net_forward.1} parent=5 // pred_check
      %p1240 = pneg %p1239
    $region34: #{simple_net_forward.1} parent=5 // pred_check_branch
      %1242 = sbr.rel (%p1240) target = $region36
    $region35: #{simple_net_forward.1} parent=5 // pred_region
      %s1243 = ssub.s32 %s8, 2
      // Predicated region
      $region37: #{simple_net_forward.1} parent=35 // pred_check
        %p1244 = pneg %p84
      $region38: #{simple_net_forward.1} parent=35 // pred_check_branch
        %1246 = sbr.rel (%p1244) target = $region40
      $region39: #{simple_net_forward.1} parent=35 // pred_region
        %s1247 = smul.u32 16, %s14
        %p1248 = scmp.lt.s32.totalorder %s1247, 127
        %s1249 = scalar_select %p1248, %s1247, 127
        %s1250 = smul.addr %s1249, 8
        %s1251 = scalar_lea.vmem %s2, %s1250
      $region40: #{simple_net_forward.1} parent=35 // pred_fallthru
        _
    $region36: #{simple_net_forward.1} parent=5 // pred_fallthru
      _
  $region6: #{simple_net_forward.1} parent=0 // loop_footer
    %s12 = sadd.s32 1, %s8
  $region7: #{simple_net_forward.1} parent=0 // loop_footer_branch
    %7 = sbr.rel target = $region3
  $region8: #{simple_net_forward.1} parent=0 // loop_exit
    _

</llo_original>
